<compile_context>
chip_gen: v7x
topology: tpu7x:2x2x1
jax: 0.10.0
libtpu: 0.0.40
codegen_flags: <defaults>
</compile_context>

<pallas_src>
import functools

import jax
import jax.numpy as jnp
from jax.experimental import pallas as pl
from jax.experimental.pallas import tpu as pltpu


LANE = 128      # lane width: every kernel output store is padded to a multiple of this.
SUBLANE = 8
# TODO(synk): for real (non-demo) channel counts on v6e/v7x pad feature dims toward 256
# (their MXUs are 2x256x256); 128 is already the full tile on v5e.


def _round_up(v, m):
    return (v + m - 1) // m * m


def _pad_to(a, rows, cols):
    return jnp.pad(a, ((0, rows - a.shape[0]), (0, cols - a.shape[1])))


def _padded_vmem_bytes(shape, dtype):
    """Bytes an array/block occupies in VMEM once padded to its (sublane, lane) tile."""
    itemsize = jnp.dtype(dtype).itemsize
    sublane = SUBLANE * max(1, 4 // itemsize)     # f32: 8, bf16: 16, int8/fp8: 32
    dims = tuple(int(d) for d in shape)
    if len(dims) == 0:
        dims = (1, 1)
    elif len(dims) == 1:
        dims = (1, dims[0])
    lead = 1
    for d in dims[:-2]:
        lead *= d
    rows = _round_up(dims[-2], sublane)
    cols = _round_up(dims[-1], LANE)
    return lead * rows * cols * itemsize


def _vmem_limit_bytes():
    """Generation-aware VMEM budget (v5e/v6e: 128 MiB physical, v7x: 64 MiB)."""
    try:
        cap = pltpu.get_tpu_info().vmem_capacity_bytes
    except Exception:
        cap = 64 * 1024 * 1024                     # conservative fallback (v7x physical)
    return min(int(cap) * 3 // 4, 112 * 1024 * 1024)


def _general_conv_kernel(adj_ref, h_ref, eagg_ref, deg_ref,
                         wm_ref, we_ref, ws_ref, bagg_ref, bself_ref,
                         o_ref, *, tile_rows, apply_relu):
    """One GeneralConv layer for one tile of destination-node rows.

      out[i] = (sum_{e:dst=i} h[src_e]) @ W_msg      ( = (adj @ h) @ W_msg )
             + (sum_{e:dst=i} edge_attr_e) @ W_edge  ( = eagg @ W_edge )
             + deg_i * (b_msg + b_edge)
             + h[i] @ W_self + b_self
    All matmuls take bf16 operands with f32 accumulation (MXU peak path on v5e/v6e/v7x);
    bias adds / ReLU stay f32 on the VPU.
    """
    f32 = jnp.float32
    bf16 = jnp.bfloat16

    adj_tile = adj_ref[...].astype(bf16)                                  # (TN, N)
    h_full = h_ref[...].astype(bf16)                                      # (N, C_in)

    # Neighbour aggregation as a dense adjacency matmul on the MXU (contraction over all
    # source nodes) -- replaces the old (E,N)/(N,E) one-hot gather/scatter matmuls.
    agg_src = jnp.dot(adj_tile, h_full, preferred_element_type=f32)       # (TN, C_in)

    out = jnp.dot(agg_src.astype(bf16), wm_ref[...].astype(bf16),
                  preferred_element_type=f32)                             # (TN, C_out)
    out += jnp.dot(eagg_ref[...].astype(bf16), we_ref[...].astype(bf16),
                   preferred_element_type=f32)

    # Self term for this tile's own rows (slice the resident node features).
    row0 = pl.multiple_of(pl.program_id(0) * tile_rows, tile_rows)
    h_tile = h_ref[pl.ds(row0, tile_rows), :].astype(bf16)                # (TN, C_in)
    out += jnp.dot(h_tile, ws_ref[...].astype(bf16), preferred_element_type=f32)

    out = out + deg_ref[...] * bagg_ref[...] + bself_ref[...]             # f32 on the VPU
    if apply_relu:
        out = jnp.maximum(out, 0.0)
    o_ref[...] = out.astype(o_ref.dtype)                                  # lane-dense store


def _general_conv(adj, h, eagg, deg, wmp, wep, wsp, bagg, bself, *,
                  apply_relu, tile_rows, vmem_limit):
    n_nodes = adj.shape[0]
    c_out = wmp.shape[1]
    assert n_nodes % tile_rows == 0

    # VMEM guard with layout-padded shapes and per-buffer multipliers:
    # blocked (pipelined) operands are double-buffered, whole-array residents are not.
    blocked = [((tile_rows, n_nodes), jnp.float32),            # adj row tile
               ((tile_rows, eagg.shape[1]), jnp.float32),      # eagg row tile
               ((tile_rows, 1), jnp.float32),                  # deg row tile
               ((tile_rows, c_out), jnp.float32)]              # output tile
    residents = [h, wmp, wep, wsp, bagg, bself]
    est = (sum(2 * _padded_vmem_bytes(s, d) for s, d in blocked)
           + sum(_padded_vmem_bytes(a.shape, a.dtype) for a in residents))
    if est * 2 > vmem_limit:   # 2x headroom: in-kernel bf16 temporaries + compiler scratch
        raise ValueError(
            f"GeneralConv tile would not fit VMEM (padded estimate {est} B, limit "
            f"{vmem_limit} B); shrink tile_rows or tile the source-node contraction.")

    kernel = functools.partial(_general_conv_kernel,
                               tile_rows=tile_rows, apply_relu=apply_relu)
    vmem_resident = pl.BlockSpec(memory_space=pltpu.MemorySpace.VMEM)

    return pl.pallas_call(
        kernel,
        out_shape=jax.ShapeDtypeStruct((n_nodes, c_out), jnp.float32),
        grid_spec=pltpu.PrefetchScalarGridSpec(
            num_scalar_prefetch=0,
            grid=(n_nodes // tile_rows,),
            in_specs=[
                pl.BlockSpec((tile_rows, n_nodes), lambda i: (i, 0)),        # adj rows
                vmem_resident,                                               # h (all nodes)
                pl.BlockSpec((tile_rows, eagg.shape[1]), lambda i: (i, 0)),  # eagg rows
                pl.BlockSpec((tile_rows, 1), lambda i: (i, 0)),              # deg rows
                vmem_resident, vmem_resident, vmem_resident,                 # W_msg/edge/self
                vmem_resident, vmem_resident,                                # biases
            ],
            out_specs=pl.BlockSpec((tile_rows, c_out), lambda i: (i, 0)),
        ),
        compiler_params=pltpu.CompilerParams(
            dimension_semantics=("parallel",),   # node tiles independent -> megacore + pipelining
            vmem_limit_bytes=vmem_limit,
        ),
    )(adj, h, eagg, deg, wmp, wep, wsp, bagg, bself)


def gnn_encoder3_forward(x, edge_index, edge_attr, params, *, tile_rows=8):
    """Forward of GNNEncoder3: conv1 -> relu -> conv2 (PyG GeneralConv defaults)."""
    n_nodes = x.shape[0]
    c_edge = edge_attr.shape[1]
    hidden = params["conv1"]["w_msg"].shape[1]
    out_ch = params["conv2"]["w_msg"].shape[1]
    h_pad = _round_up(hidden, LANE)
    o_pad = _round_up(out_ch, LANE)
    if n_nodes % tile_rows != 0:
        tile_rows = n_nodes   # TODO(synk): zero-pad the node dim for ragged graphs instead.

    # --- one-time O(E) graph preprocessing (plain XLA, outside the kernels) -------------
    # adj[i, j] = #edges j->i, eagg[i] = segment-sum of edge_attr by dst, deg[i] = in-degree.
    # Keeps every per-edge / (E,N) one-hot buffer out of VMEM; the per-layer message
    # passing then runs as dense bf16 MXU matmuls against `adj` inside the kernels.
    src = edge_index[0].astype(jnp.int32)
    dst = edge_index[1].astype(jnp.int32)
    adj = jnp.zeros((n_nodes, n_nodes), jnp.float32).at[dst, src].add(1.0)
    eagg = jnp.zeros((n_nodes, c_edge), jnp.float32).at[dst].add(edge_attr.astype(jnp.float32))
    deg = jnp.zeros((n_nodes, 1), jnp.float32).at[dst].add(1.0)

    # --- zero-pad weights/biases so every kernel output store is lane-dense (x128) ------
    p1, p2 = params["conv1"], params["conv2"]
    wm1 = _pad_to(p1["w_msg"], p1["w_msg"].shape[0], h_pad)
    we1 = _pad_to(p1["w_edge"], c_edge, h_pad)
    ws1 = _pad_to(p1["w_self"], p1["w_self"].shape[0], h_pad)
    bagg1 = _pad_to(p1["b_msg"] + p1["b_edge"], 1, h_pad)
    bself1 = _pad_to(p1["b_self"], 1, h_pad)

    wm2 = _pad_to(p2["w_msg"], h_pad, o_pad)      # zero rows absorb padded hidden columns
    we2 = _pad_to(p2["w_edge"], c_edge, o_pad)
    ws2 = _pad_to(p2["w_self"], h_pad, o_pad)
    bagg2 = _pad_to(p2["b_msg"] + p2["b_edge"], 1, o_pad)
    bself2 = _pad_to(p2["b_self"], 1, o_pad)

    vmem_limit = _vmem_limit_bytes()

    h1 = _general_conv(adj, x, eagg, deg, wm1, we1, ws1, bagg1, bself1,
                       apply_relu=True, tile_rows=tile_rows, vmem_limit=vmem_limit)
    out_padded = _general_conv(adj, h1, eagg, deg, wm2, we2, ws2, bagg2, bself2,
                               apply_relu=False, tile_rows=tile_rows, vmem_limit=vmem_limit)
    return out_padded[:, :out_ch]


def _init_linear(key, fan_in, fan_out, dtype=jnp.float32):
    kw, kb = jax.random.split(key)
    bound = 1.0 / (fan_in ** 0.5)
    # torch Linear weight is (out, in); store transposed (in, out) for the kernel.
    w = jax.random.uniform(kw, (fan_in, fan_out), dtype, -bound, bound)
    b = jax.random.uniform(kb, (1, fan_out), dtype, -bound, bound)
    return w, b


def init_gnn_encoder3_params(key, in_channels, hidden_channels, out_channels,
                             edge_channels, dtype=jnp.float32):
    keys = jax.random.split(key, 6)
    wm1, bm1 = _init_linear(keys[0], in_channels, hidden_channels, dtype)
    we1, be1 = _init_linear(keys[1], edge_channels, hidden_channels, dtype)
    ws1, bs1 = _init_linear(keys[2], in_channels, hidden_channels, dtype)
    wm2, bm2 = _init_linear(keys[3], hidden_channels, out_channels, dtype)
    we2, be2 = _init_linear(keys[4], edge_channels, out_channels, dtype)
    ws2, bs2 = _init_linear(keys[5], hidden_channels, out_channels, dtype)
    return {
        "conv1": {"w_msg": wm1, "b_msg": bm1, "w_edge": we1, "b_edge": be1,
                  "w_self": ws1, "b_self": bs1},
        "conv2": {"w_msg": wm2, "b_msg": bm2, "w_edge": we2, "b_edge": be2,
                  "w_self": ws2, "b_self": bs2},
    }


def gnn_encoder3_reference(x, edge_index, edge_attr, params):
    """Pure-jnp reference with explicit per-edge gather/scatter (f32)."""
    src = edge_index[0]
    dst = edge_index[1]

    def conv(h, p):
        msg = h[src] @ p["w_msg"] + p["b_msg"] + edge_attr @ p["w_edge"] + p["b_edge"]
        agg = jnp.zeros((h.shape[0], p["w_msg"].shape[1]), h.dtype).at[dst].add(msg)
        return agg + h @ p["w_self"] + p["b_self"]

    h1 = jax.nn.relu(conv(x, params["conv1"]))
    return conv(h1, params["conv2"])


if __name__ == "__main__":
    key = jax.random.PRNGKey(0)

    num_nodes = 16
    num_edges = 64
    in_channels = 16
    edge_channels = 8
    hidden_channels = 32
    out_channels = 16

    key, kx, ke, ks, kd = jax.random.split(key, 5)
    x = jax.random.normal(kx, (num_nodes, in_channels), jnp.float32)
    edge_attr = jax.random.normal(ke, (num_edges, edge_channels), jnp.float32)
    src = jax.random.randint(ks, (num_edges,), 0, num_nodes, dtype=jnp.int32)
    dst = jax.random.randint(kd, (num_edges,), 0, num_nodes, dtype=jnp.int32)
    edge_index = jnp.stack([src, dst])

    params = init_gnn_encoder3_params(key, in_channels, hidden_channels,
                                      out_channels, edge_channels)

    out = gnn_encoder3_forward(x, edge_index, edge_attr, params)
    out = jax.block_until_ready(out)

    ref = gnn_encoder3_reference(x, edge_index, edge_attr, params)
    assert out.shape == (num_nodes, out_channels)
    # bf16 MXU operands (per perf review) -> compare with a scale-relative tolerance.
    err = float(jnp.max(jnp.abs(out - ref)) / (jnp.max(jnp.abs(ref)) + 1e-6))
    assert err < 2e-2, f"max relative error {err}"
    print("KERNEL_OK")
</pallas_src>

<mosaic_0001>
module attributes {stable_mosaic.version = 11 : i64} {
  func.func @_general_conv_kernel(%arg0: i32, %arg1: memref<8x16xf32, #tpu.memory_space<vmem>>, %arg2: memref<16x16xf32, #tpu.memory_space<vmem>>, %arg3: memref<8x8xf32, #tpu.memory_space<vmem>>, %arg4: memref<8x1xf32, #tpu.memory_space<vmem>>, %arg5: memref<16x128xf32, #tpu.memory_space<vmem>>, %arg6: memref<8x128xf32, #tpu.memory_space<vmem>>, %arg7: memref<16x128xf32, #tpu.memory_space<vmem>>, %arg8: memref<1x128xf32, #tpu.memory_space<vmem>>, %arg9: memref<1x128xf32, #tpu.memory_space<vmem>>, %arg10: memref<8x128xf32, #tpu.memory_space<vmem>>) attributes {dimension_semantics = [#tpu.dimension_semantics<parallel>], iteration_bounds = array<i64: 2>, scalar_prefetch = 0 : i64, scratch_operands = 0 : i64, tpu.core_type = #tpu.core_type<tc>, window_params = [{transform_indices = @transform_0, window_bounds = array<i64: 8, 16>}, {pipeline_mode = #tpu.pipeline_mode<synchronous>, transform_indices = @transform_1, window_bounds = array<i64: 16, 16>}, {transform_indices = @transform_2, window_bounds = array<i64: 8, 8>}, {transform_indices = @transform_3, window_bounds = array<i64: 8, 1>}, {pipeline_mode = #tpu.pipeline_mode<synchronous>, transform_indices = @transform_4, window_bounds = array<i64: 16, 128>}, {pipeline_mode = #tpu.pipeline_mode<synchronous>, transform_indices = @transform_5, window_bounds = array<i64: 8, 128>}, {pipeline_mode = #tpu.pipeline_mode<synchronous>, transform_indices = @transform_6, window_bounds = array<i64: 16, 128>}, {pipeline_mode = #tpu.pipeline_mode<synchronous>, transform_indices = @transform_7, window_bounds = array<i64: 1, 128>}, {pipeline_mode = #tpu.pipeline_mode<synchronous>, transform_indices = @transform_8, window_bounds = array<i64: 1, 128>}, {transform_indices = @transform_9, window_bounds = array<i64: 8, 128>}]} {
    %c0 = arith.constant 0 : index
    %c0_0 = arith.constant 0 : index
    %0 = vector.load %arg1[%c0, %c0_0] : memref<8x16xf32, #tpu.memory_space<vmem>>, vector<8x16xf32>
    %1 = arith.truncf %0 : vector<8x16xf32> to vector<8x16xbf16>
    %c0_1 = arith.constant 0 : index
    %c0_2 = arith.constant 0 : index
    %2 = vector.load %arg2[%c0_1, %c0_2] : memref<16x16xf32, #tpu.memory_space<vmem>>, vector<16x16xf32>
    %3 = arith.truncf %2 : vector<16x16xf32> to vector<16x16xbf16>
    %cst = arith.constant dense<0.000000e+00> : vector<8x16xf32>
    %4 = tpu.matmul %1, %3, %cst {dimension_numbers = #tpu.dot_dimension_numbers<[1], [0], [0], [1], [0, 0, 1, 1], [], []>} : vector<8x16xbf16>, vector<16x16xbf16>, vector<8x16xf32> -> vector<8x16xf32>
    %5 = arith.truncf %4 : vector<8x16xf32> to vector<8x16xbf16>
    %c0_3 = arith.constant 0 : index
    %c0_4 = arith.constant 0 : index
    %6 = vector.load %arg5[%c0_3, %c0_4] : memref<16x128xf32, #tpu.memory_space<vmem>>, vector<16x128xf32>
    %7 = arith.truncf %6 : vector<16x128xf32> to vector<16x128xbf16>
    %cst_5 = arith.constant dense<0.000000e+00> : vector<8x128xf32>
    %8 = tpu.matmul %5, %7, %cst_5 {dimension_numbers = #tpu.dot_dimension_numbers<[1], [0], [0], [1], [0, 0, 1, 1], [], []>} : vector<8x16xbf16>, vector<16x128xbf16>, vector<8x128xf32> -> vector<8x128xf32>
    %c0_6 = arith.constant 0 : index
    %c0_7 = arith.constant 0 : index
    %9 = vector.load %arg3[%c0_6, %c0_7] : memref<8x8xf32, #tpu.memory_space<vmem>>, vector<8x8xf32>
    %10 = arith.truncf %9 : vector<8x8xf32> to vector<8x8xbf16>
    %c0_8 = arith.constant 0 : index
    %c0_9 = arith.constant 0 : index
    %11 = vector.load %arg6[%c0_8, %c0_9] : memref<8x128xf32, #tpu.memory_space<vmem>>, vector<8x128xf32>
    %12 = arith.truncf %11 : vector<8x128xf32> to vector<8x128xbf16>
    %cst_10 = arith.constant dense<0.000000e+00> : vector<8x128xf32>
    %13 = tpu.matmul %10, %12, %cst_10 {dimension_numbers = #tpu.dot_dimension_numbers<[1], [0], [0], [1], [0, 0, 1, 1], [], []>} : vector<8x8xbf16>, vector<8x128xbf16>, vector<8x128xf32> -> vector<8x128xf32>
    %14 = arith.addf %8, %13 : vector<8x128xf32>
    %c8_i32 = arith.constant 8 : i32
    %15 = arith.muli %arg0, %c8_i32 : i32
    %16 = tpu.assume_multiple %15, 8 : i32
    %17 = arith.index_cast %16 : i32 to index
    %c0_11 = arith.constant 0 : index
    %18 = vector.load %arg2[%17, %c0_11] : memref<16x16xf32, #tpu.memory_space<vmem>>, vector<8x16xf32>
    %19 = arith.truncf %18 : vector<8x16xf32> to vector<8x16xbf16>
    %c0_12 = arith.constant 0 : index
    %c0_13 = arith.constant 0 : index
    %20 = vector.load %arg7[%c0_12, %c0_13] : memref<16x128xf32, #tpu.memory_space<vmem>>, vector<16x128xf32>
    %21 = arith.truncf %20 : vector<16x128xf32> to vector<16x128xbf16>
    %cst_14 = arith.constant dense<0.000000e+00> : vector<8x128xf32>
    %22 = tpu.matmul %19, %21, %cst_14 {dimension_numbers = #tpu.dot_dimension_numbers<[1], [0], [0], [1], [0, 0, 1, 1], [], []>} : vector<8x16xbf16>, vector<16x128xbf16>, vector<8x128xf32> -> vector<8x128xf32>
    %23 = arith.addf %14, %22 : vector<8x128xf32>
    %c0_15 = arith.constant 0 : index
    %c0_16 = arith.constant 0 : index
    %24 = vector.load %arg4[%c0_15, %c0_16] : memref<8x1xf32, #tpu.memory_space<vmem>>, vector<8x1xf32>
    %c0_17 = arith.constant 0 : index
    %c0_18 = arith.constant 0 : index
    %25 = vector.load %arg8[%c0_17, %c0_18] : memref<1x128xf32, #tpu.memory_space<vmem>>, vector<1x128xf32>
    %26 = vector.broadcast %24 : vector<8x1xf32> to vector<8x128xf32>
    %27 = vector.broadcast %25 : vector<1x128xf32> to vector<8x128xf32>
    %28 = arith.mulf %26, %27 : vector<8x128xf32>
    %29 = arith.addf %23, %28 : vector<8x128xf32>
    %c0_19 = arith.constant 0 : index
    %c0_20 = arith.constant 0 : index
    %30 = vector.load %arg9[%c0_19, %c0_20] : memref<1x128xf32, #tpu.memory_space<vmem>>, vector<1x128xf32>
    %31 = vector.broadcast %30 : vector<1x128xf32> to vector<8x128xf32>
    %32 = arith.addf %29, %31 : vector<8x128xf32>
    %cst_21 = arith.constant 0.000000e+00 : f32
    %33 = vector.broadcast %cst_21 : f32 to vector<8x128xf32>
    %34 = arith.maximumf %32, %33 : vector<8x128xf32>
    %c0_22 = arith.constant 0 : index
    %c0_23 = arith.constant 0 : index
    %35 = vector.load %arg10[%c0_22, %c0_23] : memref<8x128xf32, #tpu.memory_space<vmem>>, vector<8x128xf32>
    tpu.vector_store %arg10[%c0_22, %c0_23], %34 {strides = array<i32>} : memref<8x128xf32, #tpu.memory_space<vmem>>, vector<8x128xf32>,
    return
  }
  func.func @transform_0(%arg0: i32) -> (i32, i32) {
    %c0_i32 = arith.constant 0 : i32
    %c0_i32_0 = arith.constant 0 : i32
    return %arg0, %c0_i32 : i32, i32
  }
  func.func @transform_1(%arg0: i32) -> (i32, i32) {
    %c0_i32 = arith.constant 0 : i32
    %c0_i32_0 = arith.constant 0 : i32
    %c0_i32_1 = arith.constant 0 : i32
    return %c0_i32, %c0_i32_0 : i32, i32
  }
  func.func @transform_2(%arg0: i32) -> (i32, i32) {
    %c0_i32 = arith.constant 0 : i32
    %c0_i32_0 = arith.constant 0 : i32
    return %arg0, %c0_i32 : i32, i32
  }
  func.func @transform_3(%arg0: i32) -> (i32, i32) {
    %c0_i32 = arith.constant 0 : i32
    %c0_i32_0 = arith.constant 0 : i32
    return %arg0, %c0_i32 : i32, i32
  }
  func.func @transform_4(%arg0: i32) -> (i32, i32) {
    %c0_i32 = arith.constant 0 : i32
    %c0_i32_0 = arith.constant 0 : i32
    %c0_i32_1 = arith.constant 0 : i32
    return %c0_i32, %c0_i32_0 : i32, i32
  }
  func.func @transform_5(%arg0: i32) -> (i32, i32) {
    %c0_i32 = arith.constant 0 : i32
    %c0_i32_0 = arith.constant 0 : i32
    %c0_i32_1 = arith.constant 0 : i32
    return %c0_i32, %c0_i32_0 : i32, i32
  }
  func.func @transform_6(%arg0: i32) -> (i32, i32) {
    %c0_i32 = arith.constant 0 : i32
    %c0_i32_0 = arith.constant 0 : i32
    %c0_i32_1 = arith.constant 0 : i32
    return %c0_i32, %c0_i32_0 : i32, i32
  }
  func.func @transform_7(%arg0: i32) -> (i32, i32) {
    %c0_i32 = arith.constant 0 : i32
    %c0_i32_0 = arith.constant 0 : i32
    %c0_i32_1 = arith.constant 0 : i32
    return %c0_i32, %c0_i32_0 : i32, i32
  }
  func.func @transform_8(%arg0: i32) -> (i32, i32) {
    %c0_i32 = arith.constant 0 : i32
    %c0_i32_0 = arith.constant 0 : i32
    %c0_i32_1 = arith.constant 0 : i32
    return %c0_i32, %c0_i32_0 : i32, i32
  }
  func.func @transform_9(%arg0: i32) -> (i32, i32) {
    %c0_i32 = arith.constant 0 : i32
    %c0_i32_0 = arith.constant 0 : i32
    return %arg0, %c0_i32 : i32, i32
  }
}

</mosaic_0001>

<llo_original>
// kernel: tpu_custom_call.1
$region0: #{tpu_custom_call.1}
  #allocation0 [shape = 'u32[]', space=smem, size = 0x4, offset = 0x4, fixed_abs, tag = 'smem constant byte address 0x4 - core index']
  #allocation1 [shape = 'u32[144,128]{1,0:T(1,128)}', space=vmem, size = 0x12000, scoped, tag = 'internal scratch']
  %s0 = inlined_call_operand.vmem [shape: f32[16,16], index: 0, kind: input, shape index: {}]
  %s1 = inlined_call_operand.vmem [shape: f32[16,16], index: 1, kind: input, shape index: {}]
  %s2 = inlined_call_operand.vmem [shape: f32[16,8], index: 2, kind: input, shape index: {}]
  %s3 = inlined_call_operand.vmem [shape: f32[16,1], index: 3, kind: input, shape index: {}]
  %s4 = inlined_call_operand.vmem [shape: f32[16,128], index: 4, kind: input, shape index: {}]
  %s5 = inlined_call_operand.vmem [shape: f32[8,128], index: 5, kind: input, shape index: {}]
  %s6 = inlined_call_operand.hbm [shape: f32[16,128], index: 6, kind: input, shape index: {}]
  %s7 = inlined_call_operand.vmem [shape: f32[1,128], index: 7, kind: input, shape index: {}]
  %s8 = inlined_call_operand.vmem [shape: f32[1,128], index: 8, kind: input, shape index: {}]
  %s9 = inlined_call_operand.hbm [shape: f32[16,128], index: 9, kind: output, shape index: {}]
  %s10 = sld [smem:[#allocation0]]
  $region73: #{tpu_custom_call.1} parent=0
    _
  %s12 = ssub.s32 1, %s10
  %s13 = scalar_select 0, %s12, %s10
  $region1: #{tpu_custom_call.1} parent=0
    #allocation2 [shape = 'u8[8192]{0}', space=vmem, size = 0x2000, scoped, tag = 'input window, operand 6, single buffered']
    #allocation3 [shape = 's32[2]{0}', space=sflag, size = 0x8, scoped, tag = 'scoped memory for tpu_custom_call.1']
    #allocation4 [shape = 's32[2]{0}', space=sflag, size = 0x8, scoped, tag = 'scoped memory for tpu_custom_call.1']
    #allocation5 [shape = 'u8[8192]{0}', space=vmem, size = 0x2000, scoped, tag = 'output window, operand 0']
    %14 = vsyncpa [#allocation3], 0
    %15 = vsyncpa [#allocation4], 0
    %s16 = scalar_lea.sflag [#allocation4], 1
    %17 = vsyncpa %s16, 0
    loop: start=0, step=1, limit=4
    $region2: #{tpu_custom_call.1} parent=1 // loop_pre_header
      _
    $region3: #{tpu_custom_call.1} parent=1 // loop_header
      %s19 = sphi 0, %s23
      %p20 = scmp.ge.s32.totalorder %s19, 4
      %s29 = sphi 0, %s31
      %s32 = sphi 0, %s29
      %s33 = sphi 0, %s32
      %s49 = sphi 0, %s33
      %s53 = sphi 0, %s53
      %s55 = sphi 0, %s53
      %s56 = sphi 0, %s55
      %s70 = sphi 0, %s56
      %s76 = sphi 0, %s78
      %s79 = sphi 0, %s76
      %s80 = sphi 0, %s79
      %s96 = sphi 0, %s80
      %s102 = sphi 0, %s104
      %s105 = sphi 0, %s102
      %s106 = sphi 0, %s105
      %s122 = sphi 0, %s106
      %s126 = sphi 0, %s126
      %s128 = sphi 0, %s126
      %s129 = sphi 0, %s128
      %s143 = sphi 0, %s129
      %s147 = sphi 0, %s147
      %s149 = sphi 0, %s147
      %s150 = sphi 0, %s149
      %s164 = sphi 0, %s150
      %s168 = sphi 0, %s168
      %s170 = sphi 0, %s168
      %s171 = sphi 0, %s170
      %s185 = sphi 0, %s171
      %s189 = sphi 0, %s189
      %s191 = sphi 0, %s189
      %s192 = sphi 0, %s191
      %s206 = sphi 0, %s192
      %s210 = sphi 0, %s210
      %s212 = sphi 0, %s210
      %s213 = sphi 0, %s212
      %s227 = sphi 0, %s213
      %s233 = sphi 0, %s235
      %s236 = sphi 0, %s233
      %s237 = sphi 0, %s236
      %s253 = sphi 0, %s237
    $region4: #{tpu_custom_call.1} parent=1 // loop_header_branch
      %22 = sbr.rel (%p20) target = $region8
    $region5: #{tpu_custom_call.1} parent=1 // loop_body
      %s24 = ssub.s32 %s19, 1
      %s25 = ssub.s32 %s19, 2
      %s26 = sadd.s32 %s19, 1
      %s27 = ssub.s32 %s19, %s26
      %p28 = scmp.eq.s32.totalorder %s27, 0
      %s30 = sadd.s32 %s29, 1
      %s31 = scalar_select %p28, %s29, %s30
      %p34 = pneg %p28
      %p35 = scmp.eq.s32.totalorder %s19, 1
      %p36 = por %p34, %p35
      %p37 = scmp.ne.s32.totalorder %s29, %s32
      %p38 = scmp.eq.s32.totalorder %s19, 0
      %p39 = por %p37, %p38
      %p40 = scmp.ne.s32.totalorder %s29, %s32
      %p41 = scmp.eq.s32.totalorder %s24, 1
      %p42 = por %p40, %p41
      %p43 = scmp.ne.s32.totalorder %s32, %s33
      %p44 = scmp.eq.s32.totalorder %s24, 0
      %p45 = por %p43, %p44
      %p46 = scmp.ne.s32.totalorder %s32, %s33
      %p47 = scmp.eq.s32.totalorder %s25, 1
      %p48 = por %p46, %p47
      %p50 = scmp.ne.s32.totalorder %s33, %s49
      %p51 = scmp.eq.s32.totalorder %s25, 0
      %p52 = por %p50, %p51
      %s54 = sadd.s32 %s53, 1
      %p57 = scmp.eq.s32.totalorder %s19, 1
      %p58 = scmp.ne.s32.totalorder %s53, %s55
      %p59 = scmp.eq.s32.totalorder %s19, 0
      %p60 = por %p58, %p59
      %p61 = scmp.ne.s32.totalorder %s53, %s55
      %p62 = scmp.eq.s32.totalorder %s24, 1
      %p63 = por %p61, %p62
      %p64 = scmp.ne.s32.totalorder %s55, %s56
      %p65 = scmp.eq.s32.totalorder %s24, 0
      %p66 = por %p64, %p65
      %p67 = scmp.ne.s32.totalorder %s55, %s56
      %p68 = scmp.eq.s32.totalorder %s25, 1
      %p69 = por %p67, %p68
      %p71 = scmp.ne.s32.totalorder %s56, %s70
      %p72 = scmp.eq.s32.totalorder %s25, 0
      %p73 = por %p71, %p72
      %s74 = ssub.s32 %s19, %s26
      %p75 = scmp.eq.s32.totalorder %s74, 0
      %s77 = sadd.s32 %s76, 1
      %s78 = scalar_select %p75, %s76, %s77
      %p81 = pneg %p75
      %p82 = scmp.eq.s32.totalorder %s19, 1
      %p83 = por %p81, %p82
      %p84 = scmp.ne.s32.totalorder %s76, %s79
      %p85 = scmp.eq.s32.totalorder %s19, 0
      %p86 = por %p84, %p85
      %p87 = scmp.ne.s32.totalorder %s76, %s79
      %p88 = scmp.eq.s32.totalorder %s24, 1
      %p89 = por %p87, %p88
      %p90 = scmp.ne.s32.totalorder %s79, %s80
      %p91 = scmp.eq.s32.totalorder %s24, 0
      %p92 = por %p90, %p91
      %p93 = scmp.ne.s32.totalorder %s79, %s80
      %p94 = scmp.eq.s32.totalorder %s25, 1
      %p95 = por %p93, %p94
      %p97 = scmp.ne.s32.totalorder %s80, %s96
      %p98 = scmp.eq.s32.totalorder %s25, 0
      %p99 = por %p97, %p98
      %s100 = ssub.s32 %s19, %s26
      %p101 = scmp.eq.s32.totalorder %s100, 0
      %s103 = sadd.s32 %s102, 1
      %s104 = scalar_select %p101, %s102, %s103
      %p107 = pneg %p101
      %p108 = scmp.eq.s32.totalorder %s19, 1
      %p109 = por %p107, %p108
      %p110 = scmp.ne.s32.totalorder %s102, %s105
      %p111 = scmp.eq.s32.totalorder %s19, 0
      %p112 = por %p110, %p111
      %p113 = scmp.ne.s32.totalorder %s102, %s105
      %p114 = scmp.eq.s32.totalorder %s24, 1
      %p115 = por %p113, %p114
      %p116 = scmp.ne.s32.totalorder %s105, %s106
      %p117 = scmp.eq.s32.totalorder %s24, 0
      %p118 = por %p116, %p117
      %p119 = scmp.ne.s32.totalorder %s105, %s106
      %p120 = scmp.eq.s32.totalorder %s25, 1
      %p121 = por %p119, %p120
      %p123 = scmp.ne.s32.totalorder %s106, %s122
      %p124 = scmp.eq.s32.totalorder %s25, 0
      %p125 = por %p123, %p124
      %s127 = sadd.s32 %s126, 1
      %p130 = scmp.eq.s32.totalorder %s19, 1
      %p131 = scmp.ne.s32.totalorder %s126, %s128
      %p132 = scmp.eq.s32.totalorder %s19, 0
      %p133 = por %p131, %p132
      %p134 = scmp.ne.s32.totalorder %s126, %s128
      %p135 = scmp.eq.s32.totalorder %s24, 1
      %p136 = por %p134, %p135
      %p137 = scmp.ne.s32.totalorder %s128, %s129
      %p138 = scmp.eq.s32.totalorder %s24, 0
      %p139 = por %p137, %p138
      %p140 = scmp.ne.s32.totalorder %s128, %s129
      %p141 = scmp.eq.s32.totalorder %s25, 1
      %p142 = por %p140, %p141
      %p144 = scmp.ne.s32.totalorder %s129, %s143
      %p145 = scmp.eq.s32.totalorder %s25, 0
      %p146 = por %p144, %p145
      %s148 = sadd.s32 %s147, 1
      %p151 = scmp.eq.s32.totalorder %s19, 1
      %p152 = scmp.ne.s32.totalorder %s147, %s149
      %p153 = scmp.eq.s32.totalorder %s19, 0
      %p154 = por %p152, %p153
      %p155 = scmp.ne.s32.totalorder %s147, %s149
      %p156 = scmp.eq.s32.totalorder %s24, 1
      %p157 = por %p155, %p156
      %p158 = scmp.ne.s32.totalorder %s149, %s150
      %p159 = scmp.eq.s32.totalorder %s24, 0
      %p160 = por %p158, %p159
      %p161 = scmp.ne.s32.totalorder %s149, %s150
      %p162 = scmp.eq.s32.totalorder %s25, 1
      %p163 = por %p161, %p162
      %p165 = scmp.ne.s32.totalorder %s150, %s164
      %p166 = scmp.eq.s32.totalorder %s25, 0
      %p167 = por %p165, %p166
      %s169 = sadd.s32 %s168, 1
      %p172 = scmp.eq.s32.totalorder %s19, 1
      %p173 = scmp.ne.s32.totalorder %s168, %s170
      %p174 = scmp.eq.s32.totalorder %s19, 0
      %p175 = por %p173, %p174
      %p176 = scmp.ne.s32.totalorder %s168, %s170
      %p177 = scmp.eq.s32.totalorder %s24, 1
      %p178 = por %p176, %p177
      %p179 = scmp.ne.s32.totalorder %s170, %s171
      %p180 = scmp.eq.s32.totalorder %s24, 0
      %p181 = por %p179, %p180
      %p182 = scmp.ne.s32.totalorder %s170, %s171
      %p183 = scmp.eq.s32.totalorder %s25, 1
      %p184 = por %p182, %p183
      %p186 = scmp.ne.s32.totalorder %s171, %s185
      %p187 = scmp.eq.s32.totalorder %s25, 0
      %p188 = por %p186, %p187
      %s190 = sadd.s32 %s189, 1
      %p193 = scmp.eq.s32.totalorder %s19, 1
      %p194 = scmp.ne.s32.totalorder %s189, %s191
      %p195 = scmp.eq.s32.totalorder %s19, 0
      %p196 = por %p194, %p195
      %p197 = scmp.ne.s32.totalorder %s189, %s191
      %p198 = scmp.eq.s32.totalorder %s24, 1
      %p199 = por %p197, %p198
      %p200 = scmp.ne.s32.totalorder %s191, %s192
      %p201 = scmp.eq.s32.totalorder %s24, 0
      %p202 = por %p200, %p201
      %p203 = scmp.ne.s32.totalorder %s191, %s192
      %p204 = scmp.eq.s32.totalorder %s25, 1
      %p205 = por %p203, %p204
      %p207 = scmp.ne.s32.totalorder %s192, %s206
      %p208 = scmp.eq.s32.totalorder %s25, 0
      %p209 = por %p207, %p208
      %s211 = sadd.s32 %s210, 1
      %p214 = scmp.eq.s32.totalorder %s19, 1
      %p215 = scmp.ne.s32.totalorder %s210, %s212
      %p216 = scmp.eq.s32.totalorder %s19, 0
      %p217 = por %p215, %p216
      %p218 = scmp.ne.s32.totalorder %s210, %s212
      %p219 = scmp.eq.s32.totalorder %s24, 1
      %p220 = por %p218, %p219
      %p221 = scmp.ne.s32.totalorder %s212, %s213
      %p222 = scmp.eq.s32.totalorder %s24, 0
      %p223 = por %p221, %p222
      %p224 = scmp.ne.s32.totalorder %s212, %s213
      %p225 = scmp.eq.s32.totalorder %s25, 1
      %p226 = por %p224, %p225
      %p228 = scmp.ne.s32.totalorder %s213, %s227
      %p229 = scmp.eq.s32.totalorder %s25, 0
      %p230 = por %p228, %p229
      %s231 = ssub.s32 %s19, %s26
      %p232 = scmp.eq.s32.totalorder %s231, 0
      %s234 = sadd.s32 %s233, 1
      %s235 = scalar_select %p232, %s233, %s234
      %p238 = pneg %p232
      %p239 = scmp.eq.s32.totalorder %s19, 1
      %p240 = por %p238, %p239
      %p241 = scmp.ne.s32.totalorder %s233, %s236
      %p242 = scmp.eq.s32.totalorder %s19, 0
      %p243 = por %p241, %p242
      %p244 = scmp.ne.s32.totalorder %s233, %s236
      %p245 = scmp.eq.s32.totalorder %s24, 1
      %p246 = por %p244, %p245
      %p247 = scmp.ne.s32.totalorder %s236, %s237
      %p248 = scmp.eq.s32.totalorder %s24, 0
      %p249 = por %p247, %p248
      %p250 = scmp.ne.s32.totalorder %s236, %s237
      %p251 = scmp.eq.s32.totalorder %s25, 1
      %p252 = por %p250, %p251
      %p254 = scmp.ne.s32.totalorder %s237, %s253
      %p255 = scmp.eq.s32.totalorder %s25, 0
      %p256 = por %p254, %p255
      %p257 = scmp.le.s32.totalorder 1, %s19
      %p258 = scmp.lt.s32.totalorder %s19, 3
      %p259 = pnand %p257, %p258
      %p260 = pneg %p259
      // Predicated region
      $region9: #{tpu_custom_call.1} parent=5 // pred_check
        _
      $region10: #{tpu_custom_call.1} parent=5 // pred_check_branch
        %262 = sbr.rel (%p259) target = $region12
      $region11: #{tpu_custom_call.1} parent=5 // pred_region
        %s263 = ssub.s32 %s19, 1
        // Predicated region
        $region13: #{tpu_custom_call.1} parent=11 // pred_check
          %p264 = pneg %p66
        $region14: #{tpu_custom_call.1} parent=11 // pred_check_branch
          %266 = sbr.rel (%p264) target = $region16
        $region15: #{tpu_custom_call.1} parent=11 // pred_region
          _
        $region16: #{tpu_custom_call.1} parent=11 // pred_fallthru
          _
        // Predicated region
        $region17: #{tpu_custom_call.1} parent=11 // pred_check
          %p267 = pneg %p139
        $region18: #{tpu_custom_call.1} parent=11 // pred_check_branch
          %269 = sbr.rel (%p267) target = $region20
        $region19: #{tpu_custom_call.1} parent=11 // pred_region
          _
        $region20: #{tpu_custom_call.1} parent=11 // pred_fallthru
          _
        // Predicated region
        $region21: #{tpu_custom_call.1} parent=11 // pred_check
          %p270 = pneg %p160
        $region22: #{tpu_custom_call.1} parent=11 // pred_check_branch
          %272 = sbr.rel (%p270) target = $region24
        $region23: #{tpu_custom_call.1} parent=11 // pred_region
          _
        $region24: #{tpu_custom_call.1} parent=11 // pred_fallthru
          _
        // Predicated region
        $region25: #{tpu_custom_call.1} parent=11 // pred_check
          %p273 = pneg %p181
        $region26: #{tpu_custom_call.1} parent=11 // pred_check_branch
          %275 = sbr.rel (%p273) target = $region28
        $region27: #{tpu_custom_call.1} parent=11 // pred_region
          %s277 = ssub.s32 256, 256
          %278 = vsyncadd [#allocation3], %s277
          %s279 = sshll.u32 [#allocation2], 4
          %s280 = int_to_ptr.vmem [resolvable:$true] %s279
          %285 = dma.hbm_to_vmem [thread:$0]  %s6, 256, %s280, [#allocation3], 128, 128, 8
        $region28: #{tpu_custom_call.1} parent=11 // pred_fallthru
          _
        // Predicated region
        $region29: #{tpu_custom_call.1} parent=11 // pred_check
          %p286 = pneg %p202
        $region30: #{tpu_custom_call.1} parent=11 // pred_check_branch
          %288 = sbr.rel (%p286) target = $region32
        $region31: #{tpu_custom_call.1} parent=11 // pred_region
          _
        $region32: #{tpu_custom_call.1} parent=11 // pred_fallthru
          _
        // Predicated region
        $region33: #{tpu_custom_call.1} parent=11 // pred_check
          %p289 = pneg %p223
        $region34: #{tpu_custom_call.1} parent=11 // pred_check_branch
          %291 = sbr.rel (%p289) target = $region36
        $region35: #{tpu_custom_call.1} parent=11 // pred_region
          _
        $region36: #{tpu_custom_call.1} parent=11 // pred_fallthru
          _
      $region12: #{tpu_custom_call.1} parent=5 // pred_fallthru
        _
      %p292 = scmp.lt.s32.totalorder %s19, 2
      // Predicated region
      $region37: #{tpu_custom_call.1} parent=5 // pred_check
        %p293 = pneg %p292
      $region38: #{tpu_custom_call.1} parent=5 // pred_check_branch
        %295 = sbr.rel (%p293) target = $region40
      $region39: #{tpu_custom_call.1} parent=5 // pred_region
        // Predicated region
        $region41: #{tpu_custom_call.1} parent=39 // pred_check
          %p296 = pneg %p39
        $region42: #{tpu_custom_call.1} parent=39 // pred_check_branch
          %298 = sbr.rel (%p296) target = $region44
        $region43: #{tpu_custom_call.1} parent=39 // pred_region
          %p299 = scmp.lt.s32.totalorder %s19, 1
          %s300 = scalar_select %p299, %s19, 1
          %s301 = smul.addr %s300, 8
          %s302 = scalar_lea.vmem %s0, %s301
        $region44: #{tpu_custom_call.1} parent=39 // pred_fallthru
          _
        // Predicated region
        $region45: #{tpu_custom_call.1} parent=39 // pred_check
          %p303 = pneg %p86
        $region46: #{tpu_custom_call.1} parent=39 // pred_check_branch
          %305 = sbr.rel (%p303) target = $region48
        $region47: #{tpu_custom_call.1} parent=39 // pred_region
          %p306 = scmp.lt.s32.totalorder %s19, 1
          %s307 = scalar_select %p306, %s19, 1
          %s308 = smul.addr %s307, 8
          %s309 = scalar_lea.vmem %s2, %s308
        $region48: #{tpu_custom_call.1} parent=39 // pred_fallthru
          _
        // Predicated region
        $region49: #{tpu_custom_call.1} parent=39 // pred_check
          %p310 = pneg %p112
        $region50: #{tpu_custom_call.1} parent=39 // pred_check_branch
          %312 = sbr.rel (%p310) target = $region52
        $region51: #{tpu_custom_call.1} parent=39 // pred_region
          %p313 = scmp.lt.s32.totalorder %s19, 1
          %s314 = scalar_select %p313, %s19, 1
          %s315 = smul.addr %s314, 8
          %s316 = scalar_lea.vmem %s3, %s315
        $region52: #{tpu_custom_call.1} parent=39 // pred_fallthru
          _
      $region40: #{tpu_custom_call.1} parent=5 // pred_fallthru
        _
      %p317 = scmp.le.s32.totalorder 1, %s19
      %p318 = scmp.lt.s32.totalorder %s19, 3
      %p319 = pnand %p317, %p318
      %p320 = pneg %p319
      // Predicated region
      $region53: #{tpu_custom_call.1} parent=5 // pred_check
        _
      $region54: #{tpu_custom_call.1} parent=5 // pred_check_branch
        %322 = sbr.rel (%p319) target = $region56
      $region55: #{tpu_custom_call.1} parent=5 // pred_region
        %s323 = ssub.s32 %s19, 1
        // Predicated region
        $region57: #{tpu_custom_call.1} parent=55 // pred_check
          %p324 = pneg %p181
        $region58: #{tpu_custom_call.1} parent=55 // pred_check_branch
          %326 = sbr.rel (%p324) target = $region60
        $region59: #{tpu_custom_call.1} parent=55 // pred_region
          %327 = dma.done [#allocation3], 256
        $region60: #{tpu_custom_call.1} parent=55 // pred_fallthru
          _
        %p328 = scmp.lt.s32.totalorder %s24, 1
        %s329 = scalar_select %p328, %s24, 1
        %s330 = smul.addr %s329, 8
        %s331 = scalar_lea.vmem %s0, %s330
        %p332 = pneg %p45
        %p333 = pneg %p42
        %p334 = pneg %p66
        %p335 = pneg %p63
        %p336 = scmp.lt.s32.totalorder %s24, 1
        %s337 = scalar_select %p336, %s24, 1
        %s338 = smul.addr %s337, 8
        %s339 = scalar_lea.vmem %s2, %s338
        %p340 = pneg %p92
        %p341 = pneg %p89
        %p342 = scmp.lt.s32.totalorder %s24, 1
        %s343 = scalar_select %p342, %s24, 1
        %s344 = smul.addr %s343, 8
        %s345 = scalar_lea.vmem %s3, %s344
        %p346 = pneg %p118
        %p347 = pneg %p115
        %p348 = pneg %p139
        %p349 = pneg %p136
        %p350 = pneg %p160
        %p351 = pneg %p157
        %p352 = pneg %p181
        %p353 = pneg %p178
        %p354 = pneg %p202
        %p355 = pneg %p199
        %p356 = pneg %p223
        %p357 = pneg %p220
        %p358 = pneg %p249
        %p359 = pneg %p246
        %s360 = sand.u32 %s236, 1
        %s361 = scalar_lea.sflag [#allocation4], %s360
        %s362 = sand.u32 %s236, 1
        %s363 = smul.addr %s362, 8
        %s364 = scalar_lea.vmem [#allocation5], %s363
        %p365 = scmp.lt.s32.totalorder %s24, 1
        %s366 = scalar_select %p365, %s24, 1
        %s367 = smul.addr %s366, 8
        %s368 = scalar_lea.vmem %s0, %s367
        %p369 = scmp.lt.s32.totalorder %s24, 1
        %s370 = scalar_select %p369, %s24, 1
        %s371 = smul.addr %s370, 8
        %s372 = scalar_lea.vmem %s2, %s371
        %p373 = scmp.lt.s32.totalorder %s24, 1
        %s374 = scalar_select %p373, %s24, 1
        %s375 = smul.addr %s374, 8
        %s376 = scalar_lea.vmem %s3, %s375
        %v378 = vld [vmem:[%s368] sm:$0xff]
        %v379 = vpack.c.bf16 %v378, %v378
        %v380 = vld [vmem:[%s1] sm:$0xff]
        %v381 = vld [vmem:[%s1 + $0x8] sm:$0xff]
        %v382 = vpack.c.bf16 %v381, %v380
        %vm383 = vcmask 130048
        %v385 = vsel %vm383, %v379, 0
        %387 = vmatprep.subr.bf16.mxu0 0
        %388 = vmatpush1.bf16.msra.mxu0 %v382
        %389 = vmatprep.subr.bf16.mxu0 0
        %390 = vmatpush1.bf16.msra.mxu0 0
        %391 = vmatprep.subr.bf16.mxu0 0
        %392 = vmatpush1.bf16.msra.mxu0 0
        %393 = vmatprep.subr.bf16.mxu0 0
        %394 = vmatpush1.bf16.msra.mxu0 0
        %395 = vmatprep.subr.bf16.mxu0 0
        %396 = vmatpush1.bf16.msra.mxu0 0
        %397 = vmatprep.subr.bf16.mxu0 0
        %398 = vmatpush1.bf16.msra.mxu0 0
        %399 = vmatprep.subr.bf16.mxu0 0
        %400 = vmatpush1.bf16.msra.mxu0 0
        %401 = vmatprep.subr.bf16.mxu0 0
        %402 = vmatpush1.bf16.msra.mxu0 0
        %403 = vmatprep.subr.bf16.mxu0 0
        %404 = vmatpush1.bf16.msra.mxu0 0
        %405 = vmatprep.subr.bf16.mxu0 0
        %406 = vmatpush1.bf16.msra.mxu0 0
        %407 = vmatprep.subr.bf16.mxu0 0
        %408 = vmatpush1.bf16.msra.mxu0 0
        %409 = vmatprep.subr.bf16.mxu0 0
        %410 = vmatpush1.bf16.msra.mxu0 0
        %411 = vmatprep.subr.bf16.mxu0 0
        %412 = vmatpush1.bf16.msra.mxu0 0
        %413 = vmatprep.subr.bf16.mxu0 0
        %414 = vmatpush1.bf16.msra.mxu0 0
        %415 = vmatprep.subr.bf16.mxu0 0
        %416 = vmatpush1.bf16.msra.mxu0 0
        %417 = vmatprep.subr.bf16.mxu0 0
        %418 = vmatpush1.bf16.msra.mxu0 0
        %419 = vmatprep.mubr.bf16.mxu0 0
        %420 = vmatmul.mubr.bf16.gmra.mrb[0].mxu0 %v385
        %v421 = vpop.f32.mrb[0].mxu0
        %v422 = vadd.f32 0.0, %v421
        %v423 = vpop.f32.mrb[0].mxu0
        %v424 = vpop.f32.mrb[0].mxu0
        %v425 = vpop.f32.mrb[0].mxu0
        %426 = vdwg.mxu0
        %v427 = vpack.c.bf16 %v422, %v422
        %v428 = vld [vmem:[%s4] sm:$0xff]
        %v429 = vld [vmem:[%s4 + $0x8] sm:$0xff]
        %v430 = vpack.c.bf16 %v429, %v428
        %v431 = vld [vmem:[%s372] sm:$0xff]
        %v432 = vpack.c.bf16 %v431, %v431
        %v433 = vld [vmem:[%s5] sm:$0xff]
        %v434 = vpack.c.bf16 %v433, %v433
        %vm435 = vcmask 64512
        %v437 = vsel %vm435, %v432, 0
        %vm439 = vcmask 1043456
        %v441 = vsel %vm439, %v434, 0
        %443 = vmatprep.subr.bf16.mxu0 0
        %444 = vmatpush1.bf16.msra.mxu0 %v441
        %445 = vmatprep.subr.bf16.mxu0 0
        %446 = vmatpush1.bf16.msra.mxu0 0
        %447 = vmatprep.subr.bf16.mxu0 0
        %448 = vmatpush1.bf16.msra.mxu0 0
        %449 = vmatprep.subr.bf16.mxu0 0
        %450 = vmatpush1.bf16.msra.mxu0 0
        %451 = vmatprep.subr.bf16.mxu0 0
        %452 = vmatpush1.bf16.msra.mxu0 0
        %453 = vmatprep.subr.bf16.mxu0 0
        %454 = vmatpush1.bf16.msra.mxu0 0
        %455 = vmatprep.subr.bf16.mxu0 0
        %456 = vmatpush1.bf16.msra.mxu0 0
        %457 = vmatprep.subr.bf16.mxu0 0
        %458 = vmatpush1.bf16.msra.mxu0 0
        %459 = vmatprep.subr.bf16.mxu0 0
        %460 = vmatpush1.bf16.msra.mxu0 0
        %461 = vmatprep.subr.bf16.mxu0 0
        %462 = vmatpush1.bf16.msra.mxu0 0
        %463 = vmatprep.subr.bf16.mxu0 0
        %464 = vmatpush1.bf16.msra.mxu0 0
        %465 = vmatprep.subr.bf16.mxu0 0
        %466 = vmatpush1.bf16.msra.mxu0 0
        %467 = vmatprep.subr.bf16.mxu0 0
        %468 = vmatpush1.bf16.msra.mxu0 0
        %469 = vmatprep.subr.bf16.mxu0 0
        %470 = vmatpush1.bf16.msra.mxu0 0
        %471 = vmatprep.subr.bf16.mxu0 0
        %472 = vmatpush1.bf16.msra.mxu0 0
        %473 = vmatprep.subr.bf16.mxu0 0
        %474 = vmatpush1.bf16.msra.mxu0 0
        %475 = vmatprep.mubr.bf16.mxu0 0
        %476 = vmatmul.mubr.bf16.gmra.mrb[0].mxu0 %v437
        %v477 = vpop.f32.mrb[0].mxu0
        %v478 = vadd.f32 0.0, %v477
        %v479 = vpop.f32.mrb[0].mxu0
        %v480 = vpop.f32.mrb[0].mxu0
        %v481 = vpop.f32.mrb[0].mxu0
        %482 = vdwg.mxu0
        %v484 = vsel %vm383, %v427, 0
        %486 = vmatprep.subr.bf16.mxu0 0
        %487 = vmatpush1.bf16.msra.mxu0 %v430
        %488 = vmatprep.subr.bf16.mxu0 0
        %489 = vmatpush1.bf16.msra.mxu0 0
        %490 = vmatprep.subr.bf16.mxu0 0
        %491 = vmatpush1.bf16.msra.mxu0 0
        %492 = vmatprep.subr.bf16.mxu0 0
        %493 = vmatpush1.bf16.msra.mxu0 0
        %494 = vmatprep.subr.bf16.mxu0 0
        %495 = vmatpush1.bf16.msra.mxu0 0
        %496 = vmatprep.subr.bf16.mxu0 0
        %497 = vmatpush1.bf16.msra.mxu0 0
        %498 = vmatprep.subr.bf16.mxu0 0
        %499 = vmatpush1.bf16.msra.mxu0 0
        %500 = vmatprep.subr.bf16.mxu0 0
        %501 = vmatpush1.bf16.msra.mxu0 0
        %502 = vmatprep.subr.bf16.mxu0 0
        %503 = vmatpush1.bf16.msra.mxu0 0
        %504 = vmatprep.subr.bf16.mxu0 0
        %505 = vmatpush1.bf16.msra.mxu0 0
        %506 = vmatprep.subr.bf16.mxu0 0
        %507 = vmatpush1.bf16.msra.mxu0 0
        %508 = vmatprep.subr.bf16.mxu0 0
        %509 = vmatpush1.bf16.msra.mxu0 0
        %510 = vmatprep.subr.bf16.mxu0 0
        %511 = vmatpush1.bf16.msra.mxu0 0
        %512 = vmatprep.subr.bf16.mxu0 0
        %513 = vmatpush1.bf16.msra.mxu0 0
        %514 = vmatprep.subr.bf16.mxu0 0
        %515 = vmatpush1.bf16.msra.mxu0 0
        %516 = vmatprep.subr.bf16.mxu0 0
        %517 = vmatpush1.bf16.msra.mxu0 0
        %518 = vmatprep.mubr.bf16.mxu0 0
        %519 = vmatmul.mubr.bf16.gmra.mrb[0].mxu0 %v484
        %v520 = vpop.f32.mrb[0].mxu0
        %v521 = vadd.f32 %v478, %v520
        %v522 = vpop.f32.mrb[0].mxu0
        %v523 = vpop.f32.mrb[0].mxu0
        %v524 = vpop.f32.mrb[0].mxu0
        %525 = vdwg.mxu0
        %s526 = smul.u32 %s24, 8
        %s527 = scalar_lea.vmem %s1, %s526
        %v528 = vld [vmem:[%s527] sm:$0xff]
        %v529 = vpack.c.bf16 %v528, %v528
        %v530 = vld [vmem:[#allocation2] sm:$0xff]
        %v531 = vld [vmem:[#allocation2 + $0x8] sm:$0xff]
        %v532 = vpack.c.bf16 %v531, %v530
        %v534 = vsel %vm383, %v529, 0
        %536 = vmatprep.subr.bf16.mxu0 0
        %537 = vmatpush1.bf16.msra.mxu0 %v532
        %538 = vmatprep.subr.bf16.mxu0 0
        %539 = vmatpush1.bf16.msra.mxu0 0
        %540 = vmatprep.subr.bf16.mxu0 0
        %541 = vmatpush1.bf16.msra.mxu0 0
        %542 = vmatprep.subr.bf16.mxu0 0
        %543 = vmatpush1.bf16.msra.mxu0 0
        %544 = vmatprep.subr.bf16.mxu0 0
        %545 = vmatpush1.bf16.msra.mxu0 0
        %546 = vmatprep.subr.bf16.mxu0 0
        %547 = vmatpush1.bf16.msra.mxu0 0
        %548 = vmatprep.subr.bf16.mxu0 0
        %549 = vmatpush1.bf16.msra.mxu0 0
        %550 = vmatprep.subr.bf16.mxu0 0
        %551 = vmatpush1.bf16.msra.mxu0 0
        %552 = vmatprep.subr.bf16.mxu0 0
        %553 = vmatpush1.bf16.msra.mxu0 0
        %554 = vmatprep.subr.bf16.mxu0 0
        %555 = vmatpush1.bf16.msra.mxu0 0
        %556 = vmatprep.subr.bf16.mxu0 0
        %557 = vmatpush1.bf16.msra.mxu0 0
        %558 = vmatprep.subr.bf16.mxu0 0
        %559 = vmatpush1.bf16.msra.mxu0 0
        %560 = vmatprep.subr.bf16.mxu0 0
        %561 = vmatpush1.bf16.msra.mxu0 0
        %562 = vmatprep.subr.bf16.mxu0 0
        %563 = vmatpush1.bf16.msra.mxu0 0
        %564 = vmatprep.subr.bf16.mxu0 0
        %565 = vmatpush1.bf16.msra.mxu0 0
        %566 = vmatprep.subr.bf16.mxu0 0
        %567 = vmatpush1.bf16.msra.mxu0 0
        %568 = vmatprep.mubr.bf16.mxu0 0
        %569 = vmatmul.mubr.bf16.gmra.mrb[0].mxu0 %v534
        %v570 = vpop.f32.mrb[0].mxu0
        %v571 = vadd.f32 0.0, %v570
        %v572 = vpop.f32.mrb[0].mxu0
        %v573 = vpop.f32.mrb[0].mxu0
        %v574 = vpop.f32.mrb[0].mxu0
        %575 = vdwg.mxu0
        %v576 = vadd.f32 %v521, %v571
        %v577 = vld [vmem:[%s376] sm:$0xff]
        %v578 = vld [vmem:[%s7] sm:$0x1]
        %580 = vset.pattern.permute.xlu0 0
        %581 = vperm.xlu0 %580, %v577
        %v582 = vpop.permute.xlu0 %581
        %v585 = vlaneseq
        %v586 = vshrl.u32 %v585, 7
        %v587 = vsub.s32 0, %v586
        %v588 = vrot.slane %v578, %v587
        %v590 = vmul.f32 %v582, %v588
        %v591 = vadd.f32 %v576, %v590
        %v592 = vld [vmem:[%s8] sm:$0x1]
        %v594 = vlaneseq
        %v595 = vshrl.u32 %v594, 7
        %v596 = vsub.s32 0, %v595
        %v597 = vrot.slane %v592, %v596
        %v599 = vadd.f32 %v591, %v597
        %v600 = vmax.f32 %v599, 0.0
        %601 = vst [vmem:[%s364] sm:$0xff] %v600
        %s602 = sand.u32 %s236, 1
        %s603 = scalar_lea.sflag [#allocation4], %s602
        %s604 = sand.u32 %s236, 1
        %s605 = smul.addr %s604, 8
        %s606 = scalar_lea.vmem [#allocation5], %s605
        // Predicated region
        $region61: #{tpu_custom_call.1} parent=55 // pred_check
          %p607 = pneg %p246
        $region62: #{tpu_custom_call.1} parent=55 // pred_check_branch
          %609 = sbr.rel (%p607) target = $region64
        $region63: #{tpu_custom_call.1} parent=55 // pred_region
          %s611 = ssub.s32 128, 128
          %612 = vsyncadd %s603, %s611
          %s613 = smul.addr %s24, 128
          %s614 = scalar_lea.hbm %s9, %s613
          %s616 = sshll.u32 %s606, 4
          %s617 = int_to_ptr.vmem [resolvable:$true] %s616
          %619 = dma.vmem_to_hbm [thread:$0]  %s617, 128, %s614, %s603
        $region64: #{tpu_custom_call.1} parent=55 // pred_fallthru
          _
      $region56: #{tpu_custom_call.1} parent=5 // pred_fallthru
        _
      %p620 = scmp.le.s32.totalorder 2, %s19
      // Predicated region
      $region65: #{tpu_custom_call.1} parent=5 // pred_check
        %p621 = pneg %p620
      $region66: #{tpu_custom_call.1} parent=5 // pred_check_branch
        %623 = sbr.rel (%p621) target = $region68
      $region67: #{tpu_custom_call.1} parent=5 // pred_region
        %s624 = ssub.s32 %s19, 2
        // Predicated region
        $region69: #{tpu_custom_call.1} parent=67 // pred_check
          %p625 = pneg %p252
        $region70: #{tpu_custom_call.1} parent=67 // pred_check_branch
          %627 = sbr.rel (%p625) target = $region72
        $region71: #{tpu_custom_call.1} parent=67 // pred_region
          %s628 = sand.u32 %s237, 1
          %s629 = scalar_lea.sflag [#allocation4], %s628
          %s630 = sand.u32 %s237, 1
          %s631 = smul.addr %s630, 8
          %s632 = scalar_lea.vmem [#allocation5], %s631
          %633 = dma.done %s629, 128
        $region72: #{tpu_custom_call.1} parent=67 // pred_fallthru
          _
      $region68: #{tpu_custom_call.1} parent=5 // pred_fallthru
        _
    $region6: #{tpu_custom_call.1} parent=1 // loop_footer
      %s23 = sadd.s32 1, %s19
    $region7: #{tpu_custom_call.1} parent=1 // loop_footer_branch
      %18 = sbr.rel target = $region3
    $region8: #{tpu_custom_call.1} parent=1 // loop_exit
      _
    %634 = vsyncpa [#allocation3], 1
    %s635 = scalar_lea.sflag [#allocation3], 1
    %636 = vsyncpa %s635, 1
    %637 = vsyncpa [#allocation4], 1
    %s638 = scalar_lea.sflag [#allocation4], 1
    %639 = vsyncpa %s638, 1

</llo_original>
